<compile_context>
chip_gen: v7x
topology: tpu7x:2x2x1
jax: 0.10.0
libtpu: 0.0.40
codegen_flags: <defaults>
</compile_context>

<pallas_src>
import functools

import jax
import jax.numpy as jnp
from jax.experimental import pallas as pl
from jax.experimental.pallas import tpu as pltpu


# ---------------------------------------------------------------------------
# Tiling helper
# ---------------------------------------------------------------------------
def _choose_tile(dim, target, align):
    """Largest multiple of `align` that is <= target and divides `dim`.

    If dim <= target the full dim is used (block == full array dim, which is
    always legal). Falls back to the full dim if no aligned divisor exists.
    """
    if dim <= target:
        return dim
    t = (target // align) * align
    while t >= align:
        if dim % t == 0:
            return t
        t -= align
    return dim


# ---------------------------------------------------------------------------
# Tiled linear kernel (c_attn / c_proj)
# ---------------------------------------------------------------------------
def _linear_kernel(x_ref, w_ref, b_ref, o_ref, acc_ref, *, mxu_dtype):
    @pl.when(pl.program_id(2) == 0)
    def _():
        acc_ref[...] = jnp.zeros_like(acc_ref)

    x = x_ref[...]
    w = w_ref[...]
    if mxu_dtype is not None:          # bf16 MXU operands, f32 accumulation
        x = x.astype(mxu_dtype)
        w = w.astype(mxu_dtype)
    acc_ref[...] += jnp.dot(x, w, preferred_element_type=jnp.float32)

    @pl.when(pl.program_id(2) == pl.num_programs(2) - 1)
    def _():
        o_ref[...] = (acc_ref[...] + b_ref[...].astype(jnp.float32)).astype(
            o_ref.dtype)


def pallas_linear(x, w, b, *, tm=256, tn=256, tk=512, mxu_dtype=None):
    """x: [M, K] @ w: [K, N] + b: [N] -> [M, N] (tiled, K-accumulated)."""
    M, K = x.shape
    N = w.shape[1]
    tm = _choose_tile(M, tm, 8)
    tn = _choose_tile(N, tn, 128)
    tk = _choose_tile(K, tk, 128)
    grid = (M // tm, N // tn, K // tk)

    kernel = functools.partial(_linear_kernel, mxu_dtype=mxu_dtype)
    return pl.pallas_call(
        kernel,
        out_shape=jax.ShapeDtypeStruct((M, N), x.dtype),
        grid=grid,
        in_specs=[
            pl.BlockSpec((tm, tk), lambda i, j, k: (i, k)),
            pl.BlockSpec((tk, tn), lambda i, j, k: (k, j)),
            pl.BlockSpec((1, tn), lambda i, j, k: (0, j)),
        ],
        out_specs=pl.BlockSpec((tm, tn), lambda i, j, k: (i, j)),
        scratch_shapes=[pltpu.VMEM((tm, tn), jnp.float32)],
        compiler_params=pltpu.CompilerParams(
            dimension_semantics=("parallel", "parallel", "arbitrary")),
    )(x, w, b.reshape(1, N))


# ---------------------------------------------------------------------------
# Flash-style causal attention kernel (all heads per step, merged-head output)
# ---------------------------------------------------------------------------
def _flash_attn_kernel(q_ref, k_ref, v_ref, o_ref, m_ref, l_ref, acc_ref,
                       *, num_heads, head_dim, tq, tk, mxu_dtype):
    qi = pl.program_id(1)
    ki = pl.program_id(2)
    nk = pl.num_programs(2)
    H, D = num_heads, head_dim

    @pl.when(ki == 0)
    def _():
        m_ref[...] = jnp.full_like(m_ref, -jnp.inf)
        l_ref[...] = jnp.zeros_like(l_ref)
        acc_ref[...] = jnp.zeros_like(acc_ref)

    # Last kv block intersecting the causal lower triangle of this q tile.
    last_ki = jnp.minimum(nk - 1, ((qi + 1) * tq - 1) // tk)

    @pl.when(ki <= last_ki)              # skip fully-masked (above-diagonal) blocks
    def _():
        q = q_ref[0].reshape(tq, H, D)   # heads are contiguous D-chunks of E
        k = k_ref[0].reshape(tk, H, D)
        v = v_ref[0].reshape(tk, H, D)
        if mxu_dtype is not None:
            q = q.astype(mxu_dtype)
            k = k.astype(mxu_dtype)
            v = v.astype(mxu_dtype)

        # No 1/sqrt(D) scaling (matches the reference module's _attn).
        s = jnp.einsum("qhd,khd->hqk", q, k,
                       preferred_element_type=jnp.float32)        # [H, tq, tk]

        q_pos = qi * tq + jax.lax.broadcasted_iota(jnp.int32, (1, tq, tk), 1)
        k_pos = ki * tk + jax.lax.broadcasted_iota(jnp.int32, (1, tq, tk), 2)
        s = jnp.where(k_pos <= q_pos, s, jnp.finfo(jnp.float32).min)

        m_prev = m_ref[...]                                       # [H, tq, 1]
        m_new = jnp.maximum(m_prev, jnp.max(s, axis=-1, keepdims=True))
        alpha = jnp.exp(m_prev - m_new)
        p = jnp.exp(s - m_new)                                    # f32 softmax stats
        l_ref[...] = alpha * l_ref[...] + jnp.sum(p, axis=-1, keepdims=True)
        p_in = p if mxu_dtype is None else p.astype(mxu_dtype)
        acc_ref[...] = alpha * acc_ref[...] + jnp.einsum(
            "hqk,khd->hqd", p_in, v, preferred_element_type=jnp.float32)
        m_ref[...] = m_new

    @pl.when(ki == last_ki)
    def _():
        # Normalization folded into the single final store per q tile.
        # (pl.reciprocal(..., approx=True) is the EUP fast path; exact division
        #  kept here so the numeric parity test stays tight.)
        out = acc_ref[...] / l_ref[...]                           # [H, tq, D]
        out = jnp.transpose(out, (1, 0, 2)).reshape(tq, H * D)    # merged heads
        o_ref[0] = out.astype(o_ref.dtype)


def pallas_flash_attention(qkv, num_heads, *, tq=128, tk=128, mxu_dtype=None):
    """qkv: [B, S, 3E] (c_attn output) -> attention output [B, S, E],
    already in merged-head layout (no wrapper-side transposes)."""
    B, S, three_e = qkv.shape
    E = three_e // 3
    D = E // num_heads
    tq = _choose_tile(S, tq, 8)
    tk = _choose_tile(S, tk, 8)
    nq, nk = S // tq, S // tk

    if E % 128 == 0:
        # Feed q/k/v straight out of the fused qkv buffer: block width = E,
        # the column block index selects the q/k/v slab (lane-aligned).
        q_arr = k_arr = v_arr = qkv
        col_q, col_k, col_v = 0, 1, 2
    else:
        # Small / unaligned E (toy test): slice once in the wrapper so every
        # BlockSpec keeps its last dim equal to the full array dim.
        q_arr = jax.lax.slice_in_dim(qkv, 0, E, axis=2)
        k_arr = jax.lax.slice_in_dim(qkv, E, 2 * E, axis=2)
        v_arr = jax.lax.slice_in_dim(qkv, 2 * E, 3 * E, axis=2)
        col_q = col_k = col_v = 0

    def q_map(b, qi, ki):
        return (b, qi, col_q)

    def make_kv_map(col):
        def kv_map(b, qi, ki):
            # Clamp above-diagonal kv blocks to the last useful block so the
            # pipeline re-uses the resident block instead of DMA-ing new data
            # the kernel will skip.
            last = jnp.minimum(nk - 1, ((qi + 1) * tq - 1) // tk)
            return (b, jnp.minimum(ki, last), col)
        return kv_map

    kernel = functools.partial(
        _flash_attn_kernel, num_heads=num_heads, head_dim=D,
        tq=tq, tk=tk, mxu_dtype=mxu_dtype)

    return pl.pallas_call(
        kernel,
        out_shape=jax.ShapeDtypeStruct((B, S, E), qkv.dtype),
        grid=(B, nq, nk),
        in_specs=[
            pl.BlockSpec((1, tq, E), q_map),
            pl.BlockSpec((1, tk, E), make_kv_map(col_k)),
            pl.BlockSpec((1, tk, E), make_kv_map(col_v)),
        ],
        out_specs=pl.BlockSpec((1, tq, E), lambda b, qi, ki: (b, qi, 0)),
        scratch_shapes=[
            pltpu.VMEM((num_heads, tq, 1), jnp.float32),   # running max m
            pltpu.VMEM((num_heads, tq, 1), jnp.float32),   # running sum l
            pltpu.VMEM((num_heads, tq, D), jnp.float32),   # output accumulator
        ],
        compiler_params=pltpu.CompilerParams(
            dimension_semantics=("parallel", "parallel", "arbitrary")),
    )(q_arr, k_arr, v_arr)


# ---------------------------------------------------------------------------
# Full forward
# ---------------------------------------------------------------------------
def gpt2_attention_forward(hidden_states, params, num_heads, *, mxu_dtype=None):
    """Pallas implementation of GPT2Attention.forward (layer_past=None,
    attention_mask=None, head_mask=None, use_cache=False, eval mode)."""
    B, S, E = hidden_states.shape

    # c_attn: [B*S, E] @ [E, 3E] + b
    qkv = pallas_linear(hidden_states.reshape(B * S, E),
                        params["w_attn"], params["b_attn"],
                        mxu_dtype=mxu_dtype)                       # [B*S, 3E]
    qkv = qkv.reshape(B, S, 3 * E)

    # Flash attention over all heads; output already merged-head [B, S, E].
    attn = pallas_flash_attention(qkv, num_heads, mxu_dtype=mxu_dtype)

    # c_proj (+ resid_dropout, identity in eval mode)
    out = pallas_linear(attn.reshape(B * S, E),
                        params["w_proj"], params["b_proj"],
                        mxu_dtype=mxu_dtype)
    return out.reshape(B, S, E)


# ---------------------------------------------------------------------------
# Pure-JAX reference (for correctness check)
# ---------------------------------------------------------------------------
def reference_forward(hidden_states, params, num_heads):
    B, S, E = hidden_states.shape
    D = E // num_heads
    qkv = hidden_states @ params["w_attn"] + params["b_attn"]      # [B, S, 3E]
    q, k, v = jnp.split(qkv, 3, axis=-1)

    def split_heads(t):
        return t.reshape(B, S, num_heads, D).transpose(0, 2, 1, 3)

    q, k, v = split_heads(q), split_heads(k), split_heads(v)
    w = jnp.einsum("bhqd,bhkd->bhqk", q, k)
    causal = jnp.tril(jnp.ones((S, S), dtype=bool))[None, None]
    w = jnp.where(causal, w, jnp.finfo(w.dtype).min)
    w = jax.nn.softmax(w, axis=-1)
    o = jnp.einsum("bhqk,bhkd->bhqd", w, v)
    o = o.transpose(0, 2, 1, 3).reshape(B, S, E)
    return o @ params["w_proj"] + params["b_proj"]


# ---------------------------------------------------------------------------
# Main
# ---------------------------------------------------------------------------
if __name__ == "__main__":
    def make_params(key, E):
        k_wa, k_ba, k_wp, k_bp = jax.random.split(key, 4)
        return {
            "w_attn": jax.random.normal(k_wa, (E, 3 * E), dtype=jnp.float32) * 0.02,
            "b_attn": jax.random.normal(k_ba, (3 * E,), dtype=jnp.float32) * 0.02,
            "w_proj": jax.random.normal(k_wp, (E, E), dtype=jnp.float32) * 0.02,
            "b_proj": jax.random.normal(k_bp, (E,), dtype=jnp.float32) * 0.02,
        }

    root = jax.random.PRNGKey(0)
    k_small, k_big = jax.random.split(root)

    # --- small config consistent with the module (n_embd=32, n_head=4) ------
    B, S, E, H = 2, 8, 32, 4
    kx, kp = jax.random.split(k_small)
    x = jax.random.normal(kx, (B, S, E), dtype=jnp.float32)
    params = make_params(kp, E)

    out = gpt2_attention_forward(x, params, num_heads=H)
    out = jax.block_until_ready(out)
    ref = reference_forward(x, params, num_heads=H)
    assert out.shape == (B, S, E)
    assert jnp.allclose(out, ref, atol=1e-5, rtol=1e-5), "small f32 mismatch"

    # bf16-MXU-operand fast path (production default on v6e/v7x), f32 softmax.
    out_bf16 = gpt2_attention_forward(x, params, num_heads=H,
                                      mxu_dtype=jnp.bfloat16)
    out_bf16 = jax.block_until_ready(out_bf16)
    assert jnp.allclose(out_bf16, ref, atol=2e-2, rtol=2e-2), "small bf16 mismatch"

    # --- larger config: exercises tiled grids, causal block skipping, and the
    #     fused-qkv lane-dense path (E % 128 == 0) -----------------------------
    B2, S2, E2, H2 = 1, 256, 128, 2
    kx2, kp2 = jax.random.split(k_big)
    x2 = jax.random.normal(kx2, (B2, S2, E2), dtype=jnp.float32)
    params2 = make_params(kp2, E2)

    out2 = gpt2_attention_forward(x2, params2, num_heads=H2)
    out2 = jax.block_until_ready(out2)
    ref2 = reference_forward(x2, params2, num_heads=H2)
    assert out2.shape == (B2, S2, E2)
    assert jnp.allclose(out2, ref2, atol=2e-2, rtol=2e-2), "large f32 mismatch"

    print("KERNEL_OK")
</pallas_src>

<mosaic_0001>
module attributes {stable_mosaic.version = 11 : i64} {
  func.func @_linear_kernel(%arg0: i32, %arg1: i32, %arg2: i32, %arg3: memref<16x32xf32, #tpu.memory_space<vmem>>, %arg4: memref<32x96xf32, #tpu.memory_space<vmem>>, %arg5: memref<1x96xf32, #tpu.memory_space<vmem>>, %arg6: memref<16x96xf32, #tpu.memory_space<vmem>>, %arg7: memref<16x96xf32, #tpu.memory_space<vmem>>) attributes {dimension_semantics = [#tpu.dimension_semantics<parallel>, #tpu.dimension_semantics<parallel>, #tpu.dimension_semantics<arbitrary>], iteration_bounds = array<i64: 1, 1, 1>, scalar_prefetch = 0 : i64, scratch_operands = 1 : i64, tpu.core_type = #tpu.core_type<tc>, window_params = [{transform_indices = @transform_0, window_bounds = array<i64: 16, 32>}, {transform_indices = @transform_1, window_bounds = array<i64: 32, 96>}, {transform_indices = @transform_2, window_bounds = array<i64: 1, 96>}, {transform_indices = @transform_3, window_bounds = array<i64: 16, 96>}]} {
    %c0_i32 = arith.constant 0 : i32
    %0 = arith.cmpi eq, %arg2, %c0_i32 : i32
    %1 = arith.extui %0 : i1 to i32
    %c0_i32_0 = arith.constant 0 : i32
    %2 = arith.cmpi ne, %1, %c0_i32_0 : i32
    scf.if %2 {
      %cst_10 = arith.constant 0.000000e+00 : f32
      %12 = vector.broadcast %cst_10 : f32 to vector<16x96xf32>
      %c0_11 = arith.constant 0 : index
      %c0_12 = arith.constant 0 : index
      %13 = vector.load %arg7[%c0_11, %c0_12] : memref<16x96xf32, #tpu.memory_space<vmem>>, vector<16x96xf32>
      tpu.vector_store %arg7[%c0_11, %c0_12], %12 {strides = array<i32>} : memref<16x96xf32, #tpu.memory_space<vmem>>, vector<16x96xf32>,
    } else {
    }
    %c0 = arith.constant 0 : index
    %c0_1 = arith.constant 0 : index
    %3 = vector.load %arg3[%c0, %c0_1] : memref<16x32xf32, #tpu.memory_space<vmem>>, vector<16x32xf32>
    %c0_2 = arith.constant 0 : index
    %c0_3 = arith.constant 0 : index
    %4 = vector.load %arg4[%c0_2, %c0_3] : memref<32x96xf32, #tpu.memory_space<vmem>>, vector<32x96xf32>
    %c0_4 = arith.constant 0 : index
    %c0_5 = arith.constant 0 : index
    %5 = vector.load %arg7[%c0_4, %c0_5] : memref<16x96xf32, #tpu.memory_space<vmem>>, vector<16x96xf32>
    %cst = arith.constant dense<0.000000e+00> : vector<16x96xf32>
    %6 = tpu.matmul %3, %4, %cst {dimension_numbers = #tpu.dot_dimension_numbers<[1], [0], [0], [1], [0, 0, 1, 1], [], []>} : vector<16x32xf32>, vector<32x96xf32>, vector<16x96xf32> -> vector<16x96xf32>
    %7 = arith.addf %5, %6 : vector<16x96xf32>
    %c0_6 = arith.constant 0 : index
    %c0_7 = arith.constant 0 : index
    %8 = vector.load %arg7[%c0_6, %c0_7] : memref<16x96xf32, #tpu.memory_space<vmem>>, vector<16x96xf32>
    tpu.vector_store %arg7[%c0_6, %c0_7], %7 {strides = array<i32>} : memref<16x96xf32, #tpu.memory_space<vmem>>, vector<16x96xf32>,
    %c0_i32_8 = arith.constant 0 : i32
    %9 = arith.cmpi eq, %arg2, %c0_i32_8 : i32
    %10 = arith.extui %9 : i1 to i32
    %c0_i32_9 = arith.constant 0 : i32
    %11 = arith.cmpi ne, %10, %c0_i32_9 : i32
    scf.if %11 {
      %c0_10 = arith.constant 0 : index
      %c0_11 = arith.constant 0 : index
      %12 = vector.load %arg7[%c0_10, %c0_11] : memref<16x96xf32, #tpu.memory_space<vmem>>, vector<16x96xf32>
      %c0_12 = arith.constant 0 : index
      %c0_13 = arith.constant 0 : index
      %13 = vector.load %arg5[%c0_12, %c0_13] : memref<1x96xf32, #tpu.memory_space<vmem>>, vector<1x96xf32>
      %14 = vector.broadcast %13 : vector<1x96xf32> to vector<16x96xf32>
      %15 = arith.addf %12, %14 : vector<16x96xf32>
      %c0_14 = arith.constant 0 : index
      %c0_15 = arith.constant 0 : index
      %16 = vector.load %arg6[%c0_14, %c0_15] : memref<16x96xf32, #tpu.memory_space<vmem>>, vector<16x96xf32>
      tpu.vector_store %arg6[%c0_14, %c0_15], %15 {strides = array<i32>} : memref<16x96xf32, #tpu.memory_space<vmem>>, vector<16x96xf32>,
    } else {
    }
    return
  }
  func.func @transform_0(%arg0: i32, %arg1: i32, %arg2: i32) -> (i32, i32) {
    %c0_i32 = arith.constant 0 : i32
    return %arg0, %arg2 : i32, i32
  }
  func.func @transform_1(%arg0: i32, %arg1: i32, %arg2: i32) -> (i32, i32) {
    %c0_i32 = arith.constant 0 : i32
    return %arg2, %arg1 : i32, i32
  }
  func.func @transform_2(%arg0: i32, %arg1: i32, %arg2: i32) -> (i32, i32) {
    %c0_i32 = arith.constant 0 : i32
    %c0_i32_0 = arith.constant 0 : i32
    return %c0_i32, %arg1 : i32, i32
  }
  func.func @transform_3(%arg0: i32, %arg1: i32, %arg2: i32) -> (i32, i32) {
    %c0_i32 = arith.constant 0 : i32
    return %arg0, %arg1 : i32, i32
  }
}

</mosaic_0001>

<llo_original>
// kernel: tpu_custom_call.1
$region0: #{tpu_custom_call.1}
  #allocation0 [shape = 'u32[]', space=smem, size = 0x4, offset = 0x4, fixed_abs, tag = 'smem constant byte address 0x4 - core index']
  #allocation1 [shape = 'u32[144,128]{1,0:T(1,128)}', space=vmem, size = 0x12000, scoped, tag = 'internal scratch']
  #allocation2 [shape = 'f32[16,96]{1,0:T(8,128)}', space=vmem, size = 0x2000, scoped, tag = 'scratch operand']
  %s0 = inlined_call_operand.hbm [shape: f32[16,32], index: 0, kind: input, shape index: {}]
  %s1 = inlined_call_operand.hbm [shape: f32[32,96], index: 1, kind: input, shape index: {}]
  %s2 = inlined_call_operand.vmem [shape: f32[1,96], index: 2, kind: input, shape index: {}]
  %s3 = inlined_call_operand.hbm [shape: f32[16,96], index: 3, kind: output, shape index: {}]
  %s4 = sld [smem:[#allocation0]]
  $region38: #{tpu_custom_call.1} parent=0
    _
  %s6 = ssub.s32 1, %s4
  %s7 = scalar_select 0, %s6, %s4
  $region1: #{tpu_custom_call.1} parent=0
    #allocation3 [shape = 'u8[8192]{0}', space=vmem, size = 0x2000, scoped, tag = 'input window, operand 0, single buffered']
    #allocation4 [shape = 's32[1]{0}', space=sflag, size = 0x4, scoped, tag = 'scoped memory for tpu_custom_call.1']
    #allocation5 [shape = 's32[1]{0}', space=sflag, size = 0x4, scoped, tag = 'scoped memory for tpu_custom_call.1']
    #allocation6 [shape = 'u8[16384]{0}', space=vmem, size = 0x4000, scoped, tag = 'input window, operand 1, single buffered']
    #allocation7 [shape = 's32[1]{0}', space=sflag, size = 0x4, scoped, tag = 'scoped memory for tpu_custom_call.1']
    #allocation8 [shape = 'u8[8192]{0}', space=vmem, size = 0x2000, scoped, tag = 'output window, operand 0, single buffered']
    %8 = vsyncpa [#allocation4], 0
    %9 = vsyncpa [#allocation7], 0
    %10 = vsyncpa [#allocation5], 0
    // Predicated region
    $region2: #{tpu_custom_call.1} parent=1 // pred_check
      _
    $region3: #{tpu_custom_call.1} parent=1 // pred_check_branch
      %12 = sbr.rel (0) target = $region5
    $region4: #{tpu_custom_call.1} parent=1 // pred_region
      %s14 = ssub.s32 256, 256
      %15 = vsyncadd [#allocation4], %s14
      %s16 = sshll.u32 [#allocation3], 4
      %s17 = int_to_ptr.vmem [resolvable:$true] %s16
      %22 = dma.hbm_to_vmem [thread:$0]  %s0, 256, %s17, [#allocation4], 128, 128, 8
    $region5: #{tpu_custom_call.1} parent=1 // pred_fallthru
      _
    // Predicated region
    $region6: #{tpu_custom_call.1} parent=1 // pred_check
      _
    $region7: #{tpu_custom_call.1} parent=1 // pred_check_branch
      %24 = sbr.rel (0) target = $region9
    $region8: #{tpu_custom_call.1} parent=1 // pred_region
      %s26 = ssub.s32 512, 512
      %27 = vsyncadd [#allocation7], %s26
      %s28 = sshll.u32 [#allocation6], 4
      %s29 = int_to_ptr.vmem [resolvable:$true] %s28
      %34 = dma.hbm_to_vmem [thread:$0]  %s1, 512, %s29, [#allocation7], 128, 128, 8
    $region9: #{tpu_custom_call.1} parent=1 // pred_fallthru
      _
    // Predicated region
    $region10: #{tpu_custom_call.1} parent=1 // pred_check
      _
    $region11: #{tpu_custom_call.1} parent=1 // pred_check_branch
      %36 = sbr.rel (0) target = $region13
    $region12: #{tpu_custom_call.1} parent=1 // pred_region
      _
    $region13: #{tpu_custom_call.1} parent=1 // pred_fallthru
      _
    // Predicated region
    $region14: #{tpu_custom_call.1} parent=1 // pred_check
      _
    $region15: #{tpu_custom_call.1} parent=1 // pred_check_branch
      %38 = sbr.rel (0) target = $region17
    $region16: #{tpu_custom_call.1} parent=1 // pred_region
      %39 = dma.done [#allocation4], 256
    $region17: #{tpu_custom_call.1} parent=1 // pred_fallthru
      _
    // Predicated region
    $region18: #{tpu_custom_call.1} parent=1 // pred_check
      _
    $region19: #{tpu_custom_call.1} parent=1 // pred_check_branch
      %41 = sbr.rel (0) target = $region21
    $region20: #{tpu_custom_call.1} parent=1 // pred_region
      %42 = dma.done [#allocation7], 512
    $region21: #{tpu_custom_call.1} parent=1 // pred_fallthru
      _
    %p43 = scmp.eq.s32.totalorder 0, 0
    // Predicated region
    $region22: #{tpu_custom_call.1} parent=1 // pred_check
      %p44 = pneg %p43
    $region23: #{tpu_custom_call.1} parent=1 // pred_check_branch
      %46 = sbr.rel (%p44) target = $region25
    $region24: #{tpu_custom_call.1} parent=1 // pred_region
      %vm47 = vcmask 785408
      %48 = vst.msk [vmem:[#allocation2] sm:$0xff] %vm47, 0.0
      %49 = vst.msk [vmem:[#allocation2 + $0x8] sm:$0xff] %vm47, 0.0
    $region25: #{tpu_custom_call.1} parent=1 // pred_fallthru
      _
    %v50 = vld [vmem:[#allocation3] sm:$0xff]
    %v51 = vld [vmem:[#allocation3 + $0x8] sm:$0xff]
    %v52 = vld [vmem:[#allocation6] sm:$0xff]
    %v53 = vld [vmem:[#allocation6 + $0x8] sm:$0xff]
    %v54 = vld [vmem:[#allocation6 + $0x10] sm:$0xff]
    %v55 = vld [vmem:[#allocation6 + $0x18] sm:$0xff]
    %v56 = vld [vmem:[#allocation2] sm:$0xff]
    %v57 = vld [vmem:[#allocation2 + $0x8] sm:$0xff]
    %vm58 = vcmask 261120
    %v60 = vsel %vm58, %v50, 0
    %v63 = vsel %vm58, %v51, 0
    %65 = vmatprep.subr.mxu0 0.0
    %66 = vmatpush1.msra.mxu0 %v52
    %67 = vmatprep.subr.mxu0 0.0
    %68 = vmatpush1.msra.mxu0 %v53
    %69 = vmatprep.subr.mxu0 0.0
    %70 = vmatpush1.msra.mxu0 %v54
    %71 = vmatprep.subr.mxu0 0.0
    %72 = vmatpush1.msra.mxu0 %v55
    %73 = vmatprep.subr.mxu0 0.0
    %74 = vmatpush1.msra.mxu0 0.0
    %75 = vmatprep.subr.mxu0 0.0
    %76 = vmatpush1.msra.mxu0 0.0
    %77 = vmatprep.subr.mxu0 0.0
    %78 = vmatpush1.msra.mxu0 0.0
    %79 = vmatprep.subr.mxu0 0.0
    %80 = vmatpush1.msra.mxu0 0.0
    %81 = vmatprep.subr.mxu0 0.0
    %82 = vmatpush1.msra.mxu0 0.0
    %83 = vmatprep.subr.mxu0 0.0
    %84 = vmatpush1.msra.mxu0 0.0
    %85 = vmatprep.subr.mxu0 0.0
    %86 = vmatpush1.msra.mxu0 0.0
    %87 = vmatprep.subr.mxu0 0.0
    %88 = vmatpush1.msra.mxu0 0.0
    %89 = vmatprep.subr.mxu0 0.0
    %90 = vmatpush1.msra.mxu0 0.0
    %91 = vmatprep.subr.mxu0 0.0
    %92 = vmatpush1.msra.mxu0 0.0
    %93 = vmatprep.subr.mxu0 0.0
    %94 = vmatpush1.msra.mxu0 0.0
    %95 = vmatprep.subr.mxu0 0.0
    %96 = vmatpush1.msra.mxu0 0.0
    %97 = vmatprep.subr.mxu0 0.0
    %98 = vmatpush1.msra.mxu0 0.0
    %99 = vmatprep.subr.mxu0 0.0
    %100 = vmatpush1.msra.mxu0 0.0
    %101 = vmatprep.subr.mxu0 0.0
    %102 = vmatpush1.msra.mxu0 0.0
    %103 = vmatprep.subr.mxu0 0.0
    %104 = vmatpush1.msra.mxu0 0.0
    %105 = vmatprep.subr.mxu0 0.0
    %106 = vmatpush1.msra.mxu0 0.0
    %107 = vmatprep.subr.mxu0 0.0
    %108 = vmatpush1.msra.mxu0 0.0
    %109 = vmatprep.subr.mxu0 0.0
    %110 = vmatpush1.msra.mxu0 0.0
    %111 = vmatprep.subr.mxu0 0.0
    %112 = vmatpush1.msra.mxu0 0.0
    %113 = vmatprep.subr.mxu0 0.0
    %114 = vmatpush1.msra.mxu0 0.0
    %115 = vmatprep.subr.mxu0 0.0
    %116 = vmatpush1.msra.mxu0 0.0
    %117 = vmatprep.subr.mxu0 0.0
    %118 = vmatpush1.msra.mxu0 0.0
    %119 = vmatprep.subr.mxu0 0.0
    %120 = vmatpush1.msra.mxu0 0.0
    %121 = vmatprep.subr.mxu0 0.0
    %122 = vmatpush1.msra.mxu0 0.0
    %123 = vmatprep.subr.mxu0 0.0
    %124 = vmatpush1.msra.mxu0 0.0
    %125 = vmatprep.subr.mxu0 0.0
    %126 = vmatpush1.msra.mxu0 0.0
    %127 = vmatprep.subr.mxu0 0.0
    %128 = vmatpush1.msra.mxu0 0.0
    %129 = vmatprep.mubr.f32.mxu0 0.0
    %130 = vmatmul.mubr.f32.gmra.mrb[0].mxu0 %v60
    %v131 = vpop.f32.mrb[0].mxu0
    %v132 = vadd.f32 0.0, %v131
    %v133 = vpop.f32.mrb[0].mxu0
    %134 = vmatprep.mubr.f32.mxu0 0.0
    %135 = vmatmul.mubr.f32.gmra.mrb[0].mxu0 %v63
    %v136 = vpop.f32.mrb[0].mxu0
    %v137 = vadd.f32 0.0, %v136
    %v138 = vpop.f32.mrb[0].mxu0
    %139 = vdwg.mxu0
    %v140 = vadd.f32 %v56, %v132
    %v141 = vadd.f32 %v57, %v137
    %vm142 = vcmask 785408
    %143 = vst.msk [vmem:[#allocation2] sm:$0xff] %vm142, %v140
    %144 = vst.msk [vmem:[#allocation2 + $0x8] sm:$0xff] %vm142, %v141
    // Predicated region
    $region26: #{tpu_custom_call.1} parent=1 // pred_check
      %p145 = pneg %p43
    $region27: #{tpu_custom_call.1} parent=1 // pred_check_branch
      %147 = sbr.rel (%p145) target = $region29
    $region28: #{tpu_custom_call.1} parent=1 // pred_region
      %v148 = vld [vmem:[#allocation2] sm:$0xff]
      %v149 = vld [vmem:[#allocation2 + $0x8] sm:$0xff]
      %v150 = vld [vmem:[%s2] sm:$0x1]
      %v152 = vlaneseq
      %v153 = vshrl.u32 %v152, 7
      %v154 = vsub.s32 0, %v153
      %v155 = vrot.slane %v150, %v154
      %v157 = vadd.f32 %v148, %v155
      %v158 = vadd.f32 %v149, %v155
      %159 = vst.msk [vmem:[#allocation8] sm:$0xff] %vm142, %v157
      %160 = vst.msk [vmem:[#allocation8 + $0x8] sm:$0xff] %vm142, %v158
    $region29: #{tpu_custom_call.1} parent=1 // pred_fallthru
      _
    // Predicated region
    $region30: #{tpu_custom_call.1} parent=1 // pred_check
      _
    $region31: #{tpu_custom_call.1} parent=1 // pred_check_branch
      %162 = sbr.rel (0) target = $region33
    $region32: #{tpu_custom_call.1} parent=1 // pred_region
      %s164 = ssub.s32 256, 256
      %165 = vsyncadd [#allocation5], %s164
      %s166 = sshll.u32 [#allocation8], 4
      %s167 = int_to_ptr.vmem [resolvable:$true] %s166
      %172 = dma.vmem_to_hbm [thread:$0]  %s167, 256, %s3, [#allocation5], 128, 128, 8
    $region33: #{tpu_custom_call.1} parent=1 // pred_fallthru
      _
    // Predicated region
    $region34: #{tpu_custom_call.1} parent=1 // pred_check
      _
    $region35: #{tpu_custom_call.1} parent=1 // pred_check_branch
      %174 = sbr.rel (0) target = $region37
    $region36: #{tpu_custom_call.1} parent=1 // pred_region
      %175 = dma.done [#allocation5], 256
    $region37: #{tpu_custom_call.1} parent=1 // pred_fallthru
      _
    %176 = vsyncpa [#allocation4], 1
    %177 = vsyncpa [#allocation7], 1
    %178 = vsyncpa [#allocation5], 1

</llo_original>
